<compile_context>
chip_gen: v6e
topology: v6e:2x2x1
jax: 0.10.0
libtpu: 0.0.40
codegen_flags: <defaults>
</compile_context>

<pallas_src>
import functools

import jax
import jax.numpy as jnp
from jax import lax
from jax.experimental import pallas as pl
from jax.experimental.pallas import tpu as pltpu


def _round_up(x, m):
    return (x + m - 1) // m * m


def _xent_kernel(logits_ref, label_ref, o_ref, acc_ref, *, hw, tile, inv_n, masked):
    """One (C, tile) pixel slab of one batch element.

    logits_ref/label_ref: (1, C, tile) f32  — pixels on lanes, classes on sublanes
    o_ref:                (1, 1)       f32  — scalar mean loss (written on last step)
    acc_ref:              (1, tile)    f32  — per-lane partial-sum accumulator (VMEM scratch)
    """
    b = pl.program_id(0)
    t = pl.program_id(1)

    @pl.when(jnp.logical_and(b == 0, t == 0))
    def _():
        acc_ref[...] = jnp.zeros_like(acc_ref)

    logits = logits_ref[0].astype(jnp.float32)   # (C, tile)
    label = label_ref[0].astype(jnp.float32)     # (C, tile)
    num_classes = logits.shape[0]

    # target class = first argmax of label along the class (sublane) axis,
    # expressed as a one-hot select mask -> no gather needed.
    class_iota = lax.broadcasted_iota(jnp.int32, logits.shape, 0)        # (C, tile)
    lab_max = jnp.max(label, axis=0, keepdims=True)                      # (1, tile)
    first_idx = jnp.min(
        jnp.where(label == lab_max, class_iota, num_classes),
        axis=0, keepdims=True)                                           # (1, tile)
    tgt_logit = jnp.sum(
        jnp.where(class_iota == first_idx, logits, 0.0),
        axis=0, keepdims=True)                                           # (1, tile)

    # numerically-stable logsumexp over classes (exp/log go to the EUP slot)
    m = jnp.max(logits, axis=0, keepdims=True)
    lse = m + jnp.log(jnp.sum(jnp.exp(logits - m), axis=0, keepdims=True))

    loss = lse - tgt_logit                                               # (1, tile)

    if masked:  # static: only when H*W was padded up to a tile multiple
        pix = t * tile + lax.broadcasted_iota(jnp.int32, (1, tile), 1)
        loss = jnp.where(pix < hw, loss, 0.0)

    acc_ref[...] += loss

    is_last = jnp.logical_and(b == pl.num_programs(0) - 1,
                              t == pl.num_programs(1) - 1)

    @pl.when(is_last)
    def _():
        total = jnp.sum(acc_ref[...], axis=1, keepdims=True)             # (1, 1)
        o_ref[...] = (total * inv_n).astype(o_ref.dtype)


@jax.jit
def cross_entropy_with_logits(logits_nchw, label_nchw):
    """Forward of CrossEntropyWithLogits: mean per-pixel CE vs argmax(label)."""
    B, C, H, W = logits_nchw.shape
    hw = H * W

    # (B, C, H, W) -> (B, C, H*W): contiguous reshape; pixels become the lane dim.
    lg = logits_nchw.reshape(B, C, hw)
    lb = label_nchw.reshape(B, C, hw)

    # Lane-dense pixel tiles (multiple of 128).  Per-step footprint is
    # 2 inputs x 2 pipeline buffers x (C * tile * 4B); cap it around 4 MiB so
    # the kernel stays far below even v7x's 64 MiB VMEM without touching
    # vmem_limit_bytes.
    vmem_cap_tile = max(128, (4 * 1024 * 1024) // (16 * C) // 128 * 128)
    tile = min(2048, vmem_cap_tile, _round_up(hw, 128))
    hw_pad = _round_up(hw, tile)
    if hw_pad != hw:
        pad = ((0, 0), (0, 0), (0, hw_pad - hw))
        lg = jnp.pad(lg, pad)
        lb = jnp.pad(lb, pad)
    num_tiles = hw_pad // tile

    kernel = functools.partial(
        _xent_kernel,
        hw=hw, tile=tile, inv_n=1.0 / float(B * hw), masked=(hw_pad != hw))

    in_spec = pl.BlockSpec((1, C, tile), lambda b, t: (b, 0, t))
    out = pl.pallas_call(
        kernel,
        out_shape=jax.ShapeDtypeStruct((1, 1), jnp.float32),
        grid_spec=pltpu.PrefetchScalarGridSpec(
            num_scalar_prefetch=0,
            grid=(B, num_tiles),
            in_specs=[in_spec, in_spec],
            out_specs=pl.BlockSpec((1, 1), lambda b, t: (0, 0)),
            scratch_shapes=[pltpu.VMEM((1, tile), jnp.float32)],
        ),
        compiler_params=pltpu.CompilerParams(
            # Single-scalar reduction: the output block is revisited on every
            # grid step, so both axes must stay sequential ("arbitrary").
            dimension_semantics=("arbitrary", "arbitrary")),
    )(lg, lb)
    return out[0, 0]


def _reference_forward(logits_nchw, label_nchw):
    """Pure-JAX reference mirroring the PyTorch module exactly."""
    B, C, H, W = logits_nchw.shape
    lg = jnp.transpose(logits_nchw, (0, 2, 3, 1)).reshape(-1, C).astype(jnp.float32)
    lb = jnp.transpose(label_nchw, (0, 2, 3, 1)).reshape(-1, C)
    tgt = jnp.argmax(lb, axis=1)
    logp = jax.nn.log_softmax(lg, axis=-1)
    nll = -jnp.take_along_axis(logp, tgt[:, None], axis=1)[:, 0]
    return jnp.mean(nll)


if __name__ == "__main__":
    key = jax.random.PRNGKey(0)
    k_logits, k_label = jax.random.split(key)

    B, C, H, W = 2, 4, 16, 16
    logits = jax.random.normal(k_logits, (B, C, H, W), jnp.float32)
    label = jax.random.uniform(k_label, (B, C, H, W), jnp.float32)

    loss = cross_entropy_with_logits(logits, label)
    loss = jax.block_until_ready(loss)

    ref = _reference_forward(logits, label)
    assert loss.shape == ()
    assert jnp.isfinite(loss)
    assert jnp.allclose(loss, ref, atol=1e-4, rtol=1e-4), (loss, ref)

    print("KERNEL_OK")
</pallas_src>

<mosaic_0001>
module attributes {stable_mosaic.version = 11 : i64} {
  func.func @_xent_kernel(%arg0: i32, %arg1: i32, %arg2: memref<1x4x256xf32, #tpu.memory_space<vmem>>, %arg3: memref<1x4x256xf32, #tpu.memory_space<vmem>>, %arg4: memref<1x1xf32, #tpu.memory_space<vmem>>, %arg5: memref<1x256xf32, #tpu.memory_space<vmem>>) attributes {dimension_semantics = [#tpu.dimension_semantics<arbitrary>, #tpu.dimension_semantics<arbitrary>], iteration_bounds = array<i64: 2, 1>, scalar_prefetch = 0 : i64, scratch_operands = 1 : i64, tpu.core_type = #tpu.core_type<tc>, window_params = [{transform_indices = @transform_0, window_bounds = array<i64: 1, 4, 256>}, {transform_indices = @transform_1, window_bounds = array<i64: 1, 4, 256>}, {pipeline_mode = #tpu.pipeline_mode<synchronous>, transform_indices = @transform_2, window_bounds = array<i64: 1, 1>}]} {
    %c0_i32 = arith.constant 0 : i32
    %0 = arith.cmpi eq, %arg0, %c0_i32 : i32
    %c0_i32_0 = arith.constant 0 : i32
    %1 = arith.cmpi eq, %arg1, %c0_i32_0 : i32
    %2 = arith.andi %0, %1 : i1
    %3 = arith.extui %2 : i1 to i32
    %c0_i32_1 = arith.constant 0 : i32
    %4 = arith.cmpi ne, %3, %c0_i32_1 : i32
    scf.if %4 {
      %cst_18 = arith.constant 0.000000e+00 : f32
      %42 = vector.broadcast %cst_18 : f32 to vector<1x256xf32>
      %c0_19 = arith.constant 0 : index
      %c0_20 = arith.constant 0 : index
      %43 = vector.load %arg5[%c0_19, %c0_20] : memref<1x256xf32, #tpu.memory_space<vmem>>, vector<1x256xf32>
      tpu.vector_store %arg5[%c0_19, %c0_20], %42 {strides = array<i32>} : memref<1x256xf32, #tpu.memory_space<vmem>>, vector<1x256xf32>,
    } else {
    }
    %c0 = arith.constant 0 : index
    %c0_2 = arith.constant 0 : index
    %c0_3 = arith.constant 0 : index
    %5 = vector.load %arg2[%c0, %c0_2, %c0_3] : memref<1x4x256xf32, #tpu.memory_space<vmem>>, vector<1x4x256xf32>
    %6 = vector.shape_cast %5 : vector<1x4x256xf32> to vector<4x256xf32>
    %c0_4 = arith.constant 0 : index
    %c0_5 = arith.constant 0 : index
    %c0_6 = arith.constant 0 : index
    %7 = vector.load %arg3[%c0_4, %c0_5, %c0_6] : memref<1x4x256xf32, #tpu.memory_space<vmem>>, vector<1x4x256xf32>
    %8 = vector.shape_cast %7 : vector<1x4x256xf32> to vector<4x256xf32>
    %9 = tpu.iota {dimensions = array<i32: 0>} : vector<4x256xi32>
    %cst = arith.constant dense<0xFF800000> : vector<256xf32>
    %10 = vector.multi_reduction <maximumf>, %8, %cst [0] : vector<4x256xf32> to vector<256xf32>
    %11 = vector.shape_cast %10 : vector<256xf32> to vector<1x256xf32>
    %12 = vector.broadcast %11 : vector<1x256xf32> to vector<4x256xf32>
    %13 = arith.cmpf oeq, %8, %12 : vector<4x256xf32>
    %c4_i32 = arith.constant 4 : i32
    %14 = vector.broadcast %c4_i32 : i32 to vector<4x256xi32>
    %15 = arith.select %13, %9, %14 : vector<4x256xi1>, vector<4x256xi32>
    %cst_7 = arith.constant dense<2147483647> : vector<256xi32>
    %16 = vector.multi_reduction <minsi>, %15, %cst_7 [0] : vector<4x256xi32> to vector<256xi32>
    %17 = vector.shape_cast %16 : vector<256xi32> to vector<1x256xi32>
    %18 = vector.broadcast %17 : vector<1x256xi32> to vector<4x256xi32>
    %19 = arith.cmpi eq, %9, %18 : vector<4x256xi32>
    %cst_8 = arith.constant 0.000000e+00 : f32
    %20 = vector.broadcast %cst_8 : f32 to vector<4x256xf32>
    %21 = arith.select %19, %6, %20 : vector<4x256xi1>, vector<4x256xf32>
    %cst_9 = arith.constant dense<0.000000e+00> : vector<256xf32>
    %22 = vector.multi_reduction <add>, %21, %cst_9 [0] : vector<4x256xf32> to vector<256xf32>
    %23 = vector.shape_cast %22 : vector<256xf32> to vector<1x256xf32>
    %cst_10 = arith.constant dense<0xFF800000> : vector<256xf32>
    %24 = vector.multi_reduction <maximumf>, %6, %cst_10 [0] : vector<4x256xf32> to vector<256xf32>
    %25 = vector.shape_cast %24 : vector<256xf32> to vector<1x256xf32>
    %26 = vector.broadcast %25 : vector<1x256xf32> to vector<4x256xf32>
    %27 = arith.subf %6, %26 : vector<4x256xf32>
    %28 = math.exp %27 : vector<4x256xf32>
    %cst_11 = arith.constant dense<0.000000e+00> : vector<256xf32>
    %29 = vector.multi_reduction <add>, %28, %cst_11 [0] : vector<4x256xf32> to vector<256xf32>
    %30 = vector.shape_cast %29 : vector<256xf32> to vector<1x256xf32>
    %31 = math.log %30 : vector<1x256xf32>
    %32 = arith.addf %25, %31 : vector<1x256xf32>
    %33 = arith.subf %32, %23 : vector<1x256xf32>
    %c0_12 = arith.constant 0 : index
    %c0_13 = arith.constant 0 : index
    %34 = vector.load %arg5[%c0_12, %c0_13] : memref<1x256xf32, #tpu.memory_space<vmem>>, vector<1x256xf32>
    %35 = arith.addf %34, %33 : vector<1x256xf32>
    %c0_14 = arith.constant 0 : index
    %c0_15 = arith.constant 0 : index
    %36 = vector.load %arg5[%c0_14, %c0_15] : memref<1x256xf32, #tpu.memory_space<vmem>>, vector<1x256xf32>
    tpu.vector_store %arg5[%c0_14, %c0_15], %35 {strides = array<i32>} : memref<1x256xf32, #tpu.memory_space<vmem>>, vector<1x256xf32>,
    %c1_i32 = arith.constant 1 : i32
    %37 = arith.cmpi eq, %arg0, %c1_i32 : i32
    %c0_i32_16 = arith.constant 0 : i32
    %38 = arith.cmpi eq, %arg1, %c0_i32_16 : i32
    %39 = arith.andi %37, %38 : i1
    %40 = arith.extui %39 : i1 to i32
    %c0_i32_17 = arith.constant 0 : i32
    %41 = arith.cmpi ne, %40, %c0_i32_17 : i32
    scf.if %41 {
      %c0_18 = arith.constant 0 : index
      %c0_19 = arith.constant 0 : index
      %42 = vector.load %arg5[%c0_18, %c0_19] : memref<1x256xf32, #tpu.memory_space<vmem>>, vector<1x256xf32>
      %cst_20 = arith.constant dense<0.000000e+00> : vector<1xf32>
      %43 = vector.multi_reduction <add>, %42, %cst_20 [1] : vector<1x256xf32> to vector<1xf32>
      %44 = vector.shape_cast %43 : vector<1xf32> to vector<1x1xf32>
      %cst_21 = arith.constant 0.001953125 : f32
      %45 = vector.broadcast %cst_21 : f32 to vector<1x1xf32>
      %46 = arith.mulf %44, %45 : vector<1x1xf32>
      %c0_22 = arith.constant 0 : index
      %c0_23 = arith.constant 0 : index
      %47 = vector.load %arg4[%c0_22, %c0_23] : memref<1x1xf32, #tpu.memory_space<vmem>>, vector<1x1xf32>
      tpu.vector_store %arg4[%c0_22, %c0_23], %46 {strides = array<i32>} : memref<1x1xf32, #tpu.memory_space<vmem>>, vector<1x1xf32>,
    } else {
    }
    return
  }
  func.func @transform_0(%arg0: i32, %arg1: i32) -> (i32, i32, i32) {
    %c0_i32 = arith.constant 0 : i32
    %c0_i32_0 = arith.constant 0 : i32
    return %arg0, %c0_i32, %arg1 : i32, i32, i32
  }
  func.func @transform_1(%arg0: i32, %arg1: i32) -> (i32, i32, i32) {
    %c0_i32 = arith.constant 0 : i32
    %c0_i32_0 = arith.constant 0 : i32
    return %arg0, %c0_i32, %arg1 : i32, i32, i32
  }
  func.func @transform_2(%arg0: i32, %arg1: i32) -> (i32, i32) {
    %c0_i32 = arith.constant 0 : i32
    %c0_i32_0 = arith.constant 0 : i32
    %c0_i32_1 = arith.constant 0 : i32
    return %c0_i32, %c0_i32_0 : i32, i32
  }
}

</mosaic_0001>

<llo_original>
// kernel: cross_entropy_with_logits.1
$region0: #{cross_entropy_with_logits.1}
  #allocation0 [shape = 'u32[]', space=smem, size = 0x4, offset = 0x4, fixed_abs, tag = 'smem constant byte address 0x4 - core index']
  #allocation1 [shape = 'u32[144,128]{1,0:T(1,128)}', space=vmem, size = 0x12000, scoped, tag = 'internal scratch']
  #allocation2 [shape = 'f32[1,256]{1,0:T(1,128)}', space=vmem, size = 0x400, scoped, tag = 'scratch operand']
  %s0 = inlined_call_operand.vmem [shape: f32[2,4,256], index: 0, kind: input, shape index: {}]
  %s1 = inlined_call_operand.vmem [shape: f32[2,4,256], index: 1, kind: input, shape index: {}]
  %s2 = inlined_call_operand.hbm [shape: f32[1,1], index: 2, kind: output, shape index: {}]
  %s3 = sld [smem:[#allocation0]]
  $region49: #{cross_entropy_with_logits.1} parent=0
    _
  %s5 = ssub.s32 1, %s3
  %s6 = scalar_select 0, %s5, %s3
  $region1: #{cross_entropy_with_logits.1} parent=0
    #allocation3 [shape = 'u8[512]{0}', space=vmem, size = 0x400, scoped, tag = 'output window, operand 0, single buffered']
    #allocation4 [shape = 's32[2]{0}', space=sflag, size = 0x8, scoped, tag = 'scoped memory for cross_entropy_with_logits.1']
    %7 = vsyncpa [#allocation4], 0
    loop: start=0, step=1, limit=4
    $region2: #{cross_entropy_with_logits.1} parent=1 // loop_pre_header
      _
    $region3: #{cross_entropy_with_logits.1} parent=1 // loop_header
      %s9 = sphi 0, %s13
      %p10 = scmp.ge.s32.totalorder %s9, 4
      %s16 = sphi 0, %s28
      %s17 = sphi 0, %s24
      %s18 = sphi 0, %s16
      %s19 = sphi 0, %s17
      %s20 = sphi 0, %s18
      %s21 = sphi 0, %s19
      %s33 = sphi 0, %s35
      %s36 = sphi 0, %s33
      %s37 = sphi 0, %s36
      %s53 = sphi 0, %s37
      %s61 = sphi 0, %s63
      %s64 = sphi 0, %s61
      %s65 = sphi 0, %s64
      %s81 = sphi 0, %s65
      %s85 = sphi 0, %s85
      %s87 = sphi 0, %s85
      %s88 = sphi 0, %s87
      %s102 = sphi 0, %s88
    $region4: #{cross_entropy_with_logits.1} parent=1 // loop_header_branch
      %12 = sbr.rel (%p10) target = $region8
    $region5: #{cross_entropy_with_logits.1} parent=1 // loop_body
      %s14 = ssub.s32 %s9, 1
      %s15 = ssub.s32 %s9, 2
      %s22 = sadd.s32 1, %s17
      %p23 = scmp.ge.s32.totalorder %s22, 1
      %s24 = scalar_select %p23, 0, %s22
      %s25 = sadd.s32 1, %s16
      %s26 = scalar_select %p23, %s25, %s16
      %p27 = scmp.ge.s32.totalorder %s26, 2
      %s28 = scalar_select %p27, 0, %s26
      %s29 = ssub.s32 %s16, %s28
      %s30 = ssub.s32 %s17, %s24
      %s31 = sor.u32 %s29, %s30
      %p32 = scmp.eq.s32.totalorder %s31, 0
      %s34 = sadd.s32 %s33, 1
      %s35 = scalar_select %p32, %s33, %s34
      %p38 = pneg %p32
      %p39 = scmp.eq.s32.totalorder %s9, 1
      %p40 = por %p38, %p39
      %p41 = scmp.ne.s32.totalorder %s33, %s36
      %p42 = scmp.eq.s32.totalorder %s9, 0
      %p43 = por %p41, %p42
      %p44 = scmp.ne.s32.totalorder %s33, %s36
      %p45 = scmp.eq.s32.totalorder %s14, 1
      %p46 = por %p44, %p45
      %p47 = scmp.ne.s32.totalorder %s36, %s37
      %p48 = scmp.eq.s32.totalorder %s14, 0
      %p49 = por %p47, %p48
      %p50 = scmp.ne.s32.totalorder %s36, %s37
      %p51 = scmp.eq.s32.totalorder %s15, 1
      %p52 = por %p50, %p51
      %p54 = scmp.ne.s32.totalorder %s37, %s53
      %p55 = scmp.eq.s32.totalorder %s15, 0
      %p56 = por %p54, %p55
      %s57 = ssub.s32 %s16, %s28
      %s58 = ssub.s32 %s17, %s24
      %s59 = sor.u32 %s57, %s58
      %p60 = scmp.eq.s32.totalorder %s59, 0
      %s62 = sadd.s32 %s61, 1
      %s63 = scalar_select %p60, %s61, %s62
      %p66 = pneg %p60
      %p67 = scmp.eq.s32.totalorder %s9, 1
      %p68 = por %p66, %p67
      %p69 = scmp.ne.s32.totalorder %s61, %s64
      %p70 = scmp.eq.s32.totalorder %s9, 0
      %p71 = por %p69, %p70
      %p72 = scmp.ne.s32.totalorder %s61, %s64
      %p73 = scmp.eq.s32.totalorder %s14, 1
      %p74 = por %p72, %p73
      %p75 = scmp.ne.s32.totalorder %s64, %s65
      %p76 = scmp.eq.s32.totalorder %s14, 0
      %p77 = por %p75, %p76
      %p78 = scmp.ne.s32.totalorder %s64, %s65
      %p79 = scmp.eq.s32.totalorder %s15, 1
      %p80 = por %p78, %p79
      %p82 = scmp.ne.s32.totalorder %s65, %s81
      %p83 = scmp.eq.s32.totalorder %s15, 0
      %p84 = por %p82, %p83
      %s86 = sadd.s32 %s85, 1
      %p89 = scmp.eq.s32.totalorder %s9, 1
      %p90 = scmp.ne.s32.totalorder %s85, %s87
      %p91 = scmp.eq.s32.totalorder %s9, 0
      %p92 = por %p90, %p91
      %p93 = scmp.ne.s32.totalorder %s85, %s87
      %p94 = scmp.eq.s32.totalorder %s14, 1
      %p95 = por %p93, %p94
      %p96 = scmp.ne.s32.totalorder %s87, %s88
      %p97 = scmp.eq.s32.totalorder %s14, 0
      %p98 = por %p96, %p97
      %p99 = scmp.ne.s32.totalorder %s87, %s88
      %p100 = scmp.eq.s32.totalorder %s15, 1
      %p101 = por %p99, %p100
      %p103 = scmp.ne.s32.totalorder %s88, %s102
      %p104 = scmp.eq.s32.totalorder %s15, 0
      %p105 = por %p103, %p104
      %p106 = scmp.le.s32.totalorder 1, %s9
      %p107 = scmp.lt.s32.totalorder %s9, 3
      %p108 = pnand %p106, %p107
      %p109 = pneg %p108
      // Predicated region
      $region9: #{cross_entropy_with_logits.1} parent=5 // pred_check
        _
      $region10: #{cross_entropy_with_logits.1} parent=5 // pred_check_branch
        %111 = sbr.rel (%p108) target = $region12
      $region11: #{cross_entropy_with_logits.1} parent=5 // pred_region
        %s112 = ssub.s32 %s9, 1
      $region12: #{cross_entropy_with_logits.1} parent=5 // pred_fallthru
        _
      %p113 = scmp.lt.s32.totalorder %s9, 2
      // Predicated region
      $region13: #{cross_entropy_with_logits.1} parent=5 // pred_check
        %p114 = pneg %p113
      $region14: #{cross_entropy_with_logits.1} parent=5 // pred_check_branch
        %116 = sbr.rel (%p114) target = $region16
      $region15: #{cross_entropy_with_logits.1} parent=5 // pred_region
        // Predicated region
        $region17: #{cross_entropy_with_logits.1} parent=15 // pred_check
          %p117 = pneg %p43
        $region18: #{cross_entropy_with_logits.1} parent=15 // pred_check_branch
          %119 = sbr.rel (%p117) target = $region20
        $region19: #{cross_entropy_with_logits.1} parent=15 // pred_region
          %s120 = smul.u32 2, %s17
          %p121 = scmp.lt.s32.totalorder %s16, 1
          %s122 = scalar_select %p121, %s16, 1
          %p123 = scmp.lt.s32.totalorder %s120, 1
          %s124 = scalar_select %p123, %s120, 1
          %s125 = smul.addr %s122, 2
          %s126 = sadd.s32 %s124, %s125
          %s127 = smul.addr %s126, 4
          %s128 = scalar_lea.vmem %s0, %s127
          %s129 = smul.u32 2, %s17
        $region20: #{cross_entropy_with_logits.1} parent=15 // pred_fallthru
          _
        // Predicated region
        $region21: #{cross_entropy_with_logits.1} parent=15 // pred_check
          %p130 = pneg %p71
        $region22: #{cross_entropy_with_logits.1} parent=15 // pred_check_branch
          %132 = sbr.rel (%p130) target = $region24
        $region23: #{cross_entropy_with_logits.1} parent=15 // pred_region
          %s133 = smul.u32 2, %s17
          %p134 = scmp.lt.s32.totalorder %s16, 1
          %s135 = scalar_select %p134, %s16, 1
          %p136 = scmp.lt.s32.totalorder %s133, 1
          %s137 = scalar_select %p136, %s133, 1
          %s138 = smul.addr %s135, 2
          %s139 = sadd.s32 %s137, %s138
          %s140 = smul.addr %s139, 4
          %s141 = scalar_lea.vmem %s1, %s140
          %s142 = smul.u32 2, %s17
        $region24: #{cross_entropy_with_logits.1} parent=15 // pred_fallthru
          _
      $region16: #{cross_entropy_with_logits.1} parent=5 // pred_fallthru
        _
      %p143 = scmp.le.s32.totalorder 1, %s9
      %p144 = scmp.lt.s32.totalorder %s9, 3
      %p145 = pnand %p143, %p144
      %p146 = pneg %p145
      // Predicated region
      $region25: #{cross_entropy_with_logits.1} parent=5 // pred_check
        _
      $region26: #{cross_entropy_with_logits.1} parent=5 // pred_check_branch
        %148 = sbr.rel (%p145) target = $region28
      $region27: #{cross_entropy_with_logits.1} parent=5 // pred_region
        %s149 = ssub.s32 %s9, 1
        %s150 = smul.u32 2, %s19
        %p151 = scmp.lt.s32.totalorder %s18, 1
        %s152 = scalar_select %p151, %s18, 1
        %p153 = scmp.lt.s32.totalorder %s150, 1
        %s154 = scalar_select %p153, %s150, 1
        %s155 = smul.addr %s152, 2
        %s156 = sadd.s32 %s154, %s155
        %s157 = smul.addr %s156, 4
        %s158 = scalar_lea.vmem %s0, %s157
        %p159 = pneg %p49
        %p160 = pneg %p46
        %s161 = smul.u32 2, %s19
        %p162 = scmp.lt.s32.totalorder %s18, 1
        %s163 = scalar_select %p162, %s18, 1
        %p164 = scmp.lt.s32.totalorder %s161, 1
        %s165 = scalar_select %p164, %s161, 1
        %s166 = smul.addr %s163, 2
        %s167 = sadd.s32 %s165, %s166
        %s168 = smul.addr %s167, 4
        %s169 = scalar_lea.vmem %s1, %s168
        %p170 = pneg %p77
        %p171 = pneg %p74
        %p172 = pneg %p98
        %p173 = pneg %p95
        %s174 = smul.u32 2, %s19
        %p175 = scmp.lt.s32.totalorder %s18, 1
        %s176 = scalar_select %p175, %s18, 1
        %p177 = scmp.lt.s32.totalorder %s174, 1
        %s178 = scalar_select %p177, %s174, 1
        %s179 = smul.addr %s176, 2
        %s180 = sadd.s32 %s178, %s179
        %s181 = smul.addr %s180, 4
        %s182 = scalar_lea.vmem %s0, %s181
        %s183 = smul.u32 2, %s19
        %s184 = smul.u32 2, %s19
        %p185 = scmp.lt.s32.totalorder %s18, 1
        %s186 = scalar_select %p185, %s18, 1
        %p187 = scmp.lt.s32.totalorder %s184, 1
        %s188 = scalar_select %p187, %s184, 1
        %s189 = smul.addr %s186, 2
        %s190 = sadd.s32 %s188, %s189
        %s191 = smul.addr %s190, 4
        %s192 = scalar_lea.vmem %s1, %s191
        %s193 = smul.u32 2, %s19
        %p194 = scmp.eq.s32.totalorder %s18, 0
        %p195 = scmp.eq.s32.totalorder %s19, 0
        %p196 = pnand %p194, %p195
        %p197 = pneg %p196
        // Predicated region
        $region29: #{cross_entropy_with_logits.1} parent=27 // pred_check
          _
        $region30: #{cross_entropy_with_logits.1} parent=27 // pred_check_branch
          %199 = sbr.rel (%p196) target = $region32
        $region31: #{cross_entropy_with_logits.1} parent=27 // pred_region
          %v200 = vlaneseq
          %vm201 = vcmp.ge.s32.totalorder %v200, 0
          %vm202 = vcmp.lt.s32.totalorder %v200, 256
          %vm203 = vmand %vm201, %vm202
          %204 = vst.msk [vmem:[#allocation2] sm:$0x3] %vm203, 0.0
        $region32: #{cross_entropy_with_logits.1} parent=27 // pred_fallthru
          _
        %v205 = vld [vmem:[%s182] sm:$0xff]
        %v206 = vld [vmem:[%s192] sm:$0xff]
        %v207 = vlaneseq
        %v208 = vshrl.u32 %v207, 7
        %v210 = vcombine.high %v206, %v206
        %vm212 = vcmask 1043456
        %v213 = vsel %vm212, %v206, -inf
        %v214 = vrot.slane %v213, 4
        %v215 = vmax.f32 %v213, %v214
        %v216 = vrot.slane %v215, 2
        %v217 = vmax.f32 %v215, %v216
        %v218 = vrot.slane %v217, 1
        %v219 = vmax.f32 %v217, %v218
        %v220 = vsel %vm212, %v210, -inf
        %v221 = vrot.slane %v220, 4
        %v222 = vmax.f32 %v220, %v221
        %v223 = vrot.slane %v222, 2
        %v224 = vmax.f32 %v222, %v223
        %v225 = vrot.slane %v224, 1
        %v226 = vmax.f32 %v224, %v225
        %v229 = vcombine.low %v219, %v226
        %vm231 = vcmp.eq.f32.partialorder %v206, %v229
        %v233 = vunpack.c.l.s4 839922192
        %v234 = vunpack.c.0.s8 %v233
        %v235 = vlaneseq
        %v236 = vshrl.u32 %v235, 7
        %v237 = vsub.s32 %v234, %v236
        %v238 = vrot.slane %v208, %v237
        %v239 = vsel %vm231, %v238, 4
        %v240 = vcombine.high %v239, %v239
        %v241 = vsel %vm212, %v239, 2147483647
        %v242 = vrot.slane %v241, 4
        %vm243 = vcmp.lt.s32.totalorder %v241, %v242
        %v244 = vsel %vm243, %v241, %v242
        %v245 = vrot.slane %v244, 2
        %vm246 = vcmp.lt.s32.totalorder %v244, %v245
        %v247 = vsel %vm246, %v244, %v245
        %v248 = vrot.slane %v247, 1
        %vm249 = vcmp.lt.s32.totalorder %v247, %v248
        %v250 = vsel %vm249, %v247, %v248
        %v251 = vsel %vm212, %v240, 2147483647
        %v252 = vrot.slane %v251, 4
        %vm253 = vcmp.lt.s32.totalorder %v251, %v252
        %v254 = vsel %vm253, %v251, %v252
        %v255 = vrot.slane %v254, 2
        %vm256 = vcmp.lt.s32.totalorder %v254, %v255
        %v257 = vsel %vm256, %v254, %v255
        %v258 = vrot.slane %v257, 1
        %vm259 = vcmp.lt.s32.totalorder %v257, %v258
        %v260 = vsel %vm259, %v257, %v258
        %vm261 = vcmp.eq.s32.totalorder %v208, %v250
        %vm262 = vcmp.eq.s32.totalorder %v208, %v260
        %v264 = vcombine.high %v205, %v205
        %v266 = vsel %vm261, %v205, 0.0
        %v267 = vsel %vm262, %v264, 0.0
        %v268 = vsel %vm212, %v266, 0.0
        %v269 = vrot.slane %v268, 4
        %v270 = vadd.f32 %v268, %v269
        %v271 = vrot.slane %v270, 2
        %v272 = vadd.f32 %v270, %v271
        %v273 = vrot.slane %v272, 1
        %v274 = vadd.f32 %v272, %v273
        %v275 = vsel %vm212, %v267, 0.0
        %v276 = vrot.slane %v275, 4
        %v277 = vadd.f32 %v275, %v276
        %v278 = vrot.slane %v277, 2
        %v279 = vadd.f32 %v277, %v278
        %v280 = vrot.slane %v279, 1
        %v281 = vadd.f32 %v279, %v280
        %v282 = vsel %vm212, %v205, -inf
        %v283 = vrot.slane %v282, 4
        %v284 = vmax.f32 %v282, %v283
        %v285 = vrot.slane %v284, 2
        %v286 = vmax.f32 %v284, %v285
        %v287 = vrot.slane %v286, 1
        %v288 = vmax.f32 %v286, %v287
        %v289 = vsel %vm212, %v264, -inf
        %v290 = vrot.slane %v289, 4
        %v291 = vmax.f32 %v289, %v290
        %v292 = vrot.slane %v291, 2
        %v293 = vmax.f32 %v291, %v292
        %v294 = vrot.slane %v293, 1
        %v295 = vmax.f32 %v293, %v294
        %v298 = vcombine.low %v288, %v295
        %v300 = vsub.f32 %v205, %v298
        %v301 = vmul.f32 %v300, 1.442695
        %v302 = vpow.pop %v301
        %v304 = vcombine.high %v302, %v302
        %v306 = vsel %vm212, %v302, 0.0
        %v307 = vrot.slane %v306, 4
        %v308 = vadd.f32 %v306, %v307
        %v309 = vrot.slane %v308, 2
        %v310 = vadd.f32 %v308, %v309
        %v311 = vrot.slane %v310, 1
        %v312 = vadd.f32 %v310, %v311
        %v313 = vsel %vm212, %v304, 0.0
        %v314 = vrot.slane %v313, 4
        %v315 = vadd.f32 %v313, %v314
        %v316 = vrot.slane %v315, 2
        %v317 = vadd.f32 %v315, %v316
        %v318 = vrot.slane %v317, 1
        %v319 = vadd.f32 %v317, %v318
        %v320 = vlog2.pop %v312
        %v321 = vmul.f32 %v320, 0.6931472
        %v322 = vlog2.pop %v319
        %v323 = vmul.f32 %v322, 0.6931472
        %v324 = vadd.f32 %v288, %v321
        %v325 = vadd.f32 %v295, %v323
        %v326 = vsub.f32 %v324, %v274
        %v327 = vsub.f32 %v325, %v281
        %v328 = vld [vmem:[#allocation2] sm:$0x3]
        %v331 = vcombine.low %v326, %v327
        %v333 = vunpack.c.l.s4 1966171168
        %v334 = vunpack.c.0.s8 %v333
        %v335 = vlaneseq
        %v336 = vshrl.u32 %v335, 7
        %v337 = vsub.s32 %v334, %v336
        %v338 = vrot.slane %v331, %v337
        %v340 = vunpack.c.l.s4 1966171168
        %v341 = vunpack.c.0.s8 %v340
        %v342 = vlaneseq
        %v343 = vshrl.u32 %v342, 7
        %v344 = vsub.s32 %v341, %v343
        %v345 = vrot.slane %v338, %v344
        %v347 = vadd.f32 %v328, %v345
        %v348 = vlaneseq
        %vm349 = vcmp.ge.s32.totalorder %v348, 0
        %vm350 = vcmp.lt.s32.totalorder %v348, 256
        %vm351 = vmand %vm349, %vm350
        %352 = vst.msk [vmem:[#allocation2] sm:$0x3] %vm351, %v347
        %p353 = scmp.eq.s32.totalorder %s18, 1
        %p354 = pnand %p353, %p195
        %p355 = pneg %p354
        // Predicated region
        $region33: #{cross_entropy_with_logits.1} parent=27 // pred_check
          _
        $region34: #{cross_entropy_with_logits.1} parent=27 // pred_check_branch
          %357 = sbr.rel (%p354) target = $region36
        $region35: #{cross_entropy_with_logits.1} parent=27 // pred_region
          %v358 = vld [vmem:[#allocation2] sm:$0x3]
          %v360 = vlaneseq
          %v361 = vshrl.u32 %v360, 7
          %v362 = vsub.s32 0, %v361
          %v363 = vrot.slane %v358, %v362
          %v364 = vlaneseq
          %v365 = vshrl.u32 %v364, 7
          %v366 = vsub.s32 1, %v365
          %v367 = vrot.slane %v358, %v366
          %vm370 = vcmask 1040384
          %v371 = vsel %vm370, %v363, 0.0
          %v372 = vsel %vm370, %v367, 0.0
          %v373 = vadd.f32 %v371, %v372
          %374 = vadd.xlane.f32.xlu0 %v373
          %v375 = vpop.xlane.xlu0 %374
          %v376 = vmul.f32 %v375, 0.001953125
          %vm377 = vcmask 0
          %378 = vst.msk [vmem:[#allocation3] sm:$0x1] %vm377, %v376
        $region36: #{cross_entropy_with_logits.1} parent=27 // pred_fallthru
          _
        // Predicated region
        $region37: #{cross_entropy_with_logits.1} parent=27 // pred_check
          %p379 = pneg %p95
        $region38: #{cross_entropy_with_logits.1} parent=27 // pred_check_branch
          %381 = sbr.rel (%p379) target = $region40
        $region39: #{cross_entropy_with_logits.1} parent=27 // pred_region
          %s383 = ssub.s32 16, 16
          %384 = vsyncadd [#allocation4], %s383
          %s386 = sshll.u32 [#allocation3], 4
          %s387 = int_to_ptr.vmem [resolvable:$true] %s386
          %389 = dma.vmem_to_hbm [thread:$0]  %s387, 16, %s2, [#allocation4]
        $region40: #{cross_entropy_with_logits.1} parent=27 // pred_fallthru
          _
        // Predicated region
        $region41: #{cross_entropy_with_logits.1} parent=27 // pred_check
          %p390 = pneg %p95
        $region42: #{cross_entropy_with_logits.1} parent=27 // pred_check_branch
          %392 = sbr.rel (%p390) target = $region44
        $region43: #{cross_entropy_with_logits.1} parent=27 // pred_region
          %393 = dma.done [#allocation4], 16
        $region44: #{cross_entropy_with_logits.1} parent=27 // pred_fallthru
          _
      $region28: #{cross_entropy_with_logits.1} parent=5 // pred_fallthru
        _
      %p394 = scmp.le.s32.totalorder 2, %s9
      // Predicated region
      $region45: #{cross_entropy_with_logits.1} parent=5 // pred_check
        %p395 = pneg %p394
      $region46: #{cross_entropy_with_logits.1} parent=5 // pred_check_branch
        %397 = sbr.rel (%p395) target = $region48
      $region47: #{cross_entropy_with_logits.1} parent=5 // pred_region
        %s398 = ssub.s32 %s9, 2
      $region48: #{cross_entropy_with_logits.1} parent=5 // pred_fallthru
        _
    $region6: #{cross_entropy_with_logits.1} parent=1 // loop_footer
      %s13 = sadd.s32 1, %s9
    $region7: #{cross_entropy_with_logits.1} parent=1 // loop_footer_branch
      %8 = sbr.rel target = $region3
    $region8: #{cross_entropy_with_logits.1} parent=1 // loop_exit
      _
    %399 = vsyncpa [#allocation4], 1
    %s400 = scalar_lea.sflag [#allocation4], 1
    %401 = vsyncpa %s400, 1

</llo_original>
